<compile_context>
chip_gen: v5e
topology: v5e:2x2
jax: 0.10.0
libtpu: 0.0.40
codegen_flags: <defaults>
</compile_context>

<pallas_src>
import functools

import jax
import jax.numpy as jnp
from jax.experimental import pallas as pl
from jax.experimental.pallas import tpu as pltpu


def _round_up(x, m):
    return ((x + m - 1) // m) * m


def _ourloss_kernel(feat_ref, protos_ref, logits_ref, labels_ref, out_ref, *,
                    batch, inv_temp):
    feat = feat_ref[...]                                # [TB, D]   input dtype (f32/bf16)
    protos = protos_ref[...]                            # [P,  D]   L2-normalized, feat dtype
    logits = logits_ref[...].astype(jnp.float32)        # [TB, CL]  upcast in-kernel
    labels = labels_ref[...]                            # [TB, 1]   int32

    tb, cl = logits.shape
    p = protos.shape[0]

    # Rows that actually belong to the batch (the last grid tile may run past B; the
    # out-of-bounds part of the block is stale VMEM, so mask with select, not multiply).
    row_idx = pl.program_id(0) * tb + jax.lax.broadcasted_iota(jnp.int32, (tb, 1), 0)
    row_valid = row_idx < batch

    # ---- per-row cross entropy: logsumexp(logits) - logits[label] ---------------
    lmax = jnp.max(logits, axis=1, keepdims=True)
    lse_logits = lmax + jnp.log(jnp.sum(jnp.exp(logits - lmax), axis=1, keepdims=True))
    cls_lane = jax.lax.broadcasted_iota(jnp.int32, (tb, cl), 1)
    picked_logit = jnp.sum(jnp.where(cls_lane == labels, logits, 0.0),
                           axis=1, keepdims=True)
    ce_row = jnp.where(row_valid, lse_logits - picked_logit, 0.0)      # [TB, 1]

    # ---- per-row supervised-contrastive term ------------------------------------
    # dots = (feat @ protos.T) / temperature, scaled in f32 after the MXU.
    dots = jax.lax.dot_general(
        feat, protos,
        dimension_numbers=(((1,), (1,)), ((), ())),
        preferred_element_type=jnp.float32) * jnp.float32(inv_temp)    # [TB, P]
    dmax = jnp.max(dots, axis=1, keepdims=True)
    lse_dots = dmax + jnp.log(jnp.sum(jnp.exp(dots - dmax), axis=1, keepdims=True))
    proto_lane = jax.lax.broadcasted_iota(jnp.int32, (tb, p), 1)
    picked_dot = jnp.sum(jnp.where(proto_lane == labels, dots, 0.0),
                         axis=1, keepdims=True)
    # 1 iff the row's label has a prototype (labels in [0, P)); no cross-lane reduce.
    has_pos = jnp.logical_and(labels >= 0, labels < p).astype(jnp.float32)
    sim_row = jnp.where(row_valid, picked_dot - has_pos * lse_dots, 0.0)  # sum_j mask*log_prob

    # ---- lane-dense partial sums: lane 0 = sum(ce), lane 1 = sum(masked log-prob) ----
    lane = jax.lax.broadcasted_iota(jnp.int32, (tb, 128), 1)
    contrib = jnp.where(lane == 0, ce_row, 0.0) + jnp.where(lane == 1, sim_row, 0.0)
    out_ref[0] = jnp.sum(contrib, axis=0, keepdims=True)               # [1, 128]


def ourloss(features_front, logits, labels, text_prototype, *,
            num_class, temperature=0.1, alpha=1.0, beta=1.0, jigsaw=True,
            block_rows=1024):
    """JAX/Pallas equivalent of Ourloss.forward (opt.temp_ci=temperature, opt.jigsaw)."""
    B, D = features_front.shape
    CL = logits.shape[1]
    P = text_prototype.shape[0]
    assert P == num_class - 1, "Ourloss uses prototypes for classes 0..num_class-2"

    # --- batch-independent prototype normalization (tiny; hoisted out of the kernel) ---
    protos_f32 = text_prototype.astype(jnp.float32)
    norm = jnp.sqrt(jnp.sum(protos_f32 * protos_f32, axis=1, keepdims=True))
    protos_n = (protos_f32 / jnp.maximum(norm, 1e-12)).astype(features_front.dtype)

    labels2d = labels.reshape(B, 1).astype(jnp.int32)   # negligible copy (B int32)

    # --- generation-aware batch tiling (no padded copies of the big operands) ---
    feat_bytes = features_front.dtype.itemsize
    logit_bytes = logits.dtype.itemsize
    row_bytes = D * feat_bytes + CL * logit_bytes + 4
    try:
        vmem_cap = int(pltpu.get_tpu_info().vmem_capacity_bytes)
    except Exception:
        vmem_cap = 64 * 1024 * 1024                     # v7x per-TC capacity as safe floor
    tile_budget = int(min(max(vmem_cap // 5, 4 << 20), 24 << 20))
    TB = max(8, min(block_rows, tile_budget // row_bytes) // 8 * 8)
    if B >= 16:
        # keep at least two tiles so the parallel axis feeds both v7x TensorCores
        TB = min(TB, _round_up((B + 1) // 2, 8))
    if TB >= B:
        TB = B                                          # single tile; block == full batch dim
    num_tiles = pl.cdiv(B, TB)

    proto_bytes = P * D * feat_bytes
    tile_bytes = TB * row_bytes
    vmem_limit = int(min(max(vmem_cap - (4 << 20), 16 << 20),
                         max(32 << 20, 2 * tile_bytes + 2 * proto_bytes + (8 << 20))))

    kernel = functools.partial(_ourloss_kernel, batch=B,
                               inv_temp=1.0 / float(temperature))
    partials = pl.pallas_call(
        kernel,
        out_shape=jax.ShapeDtypeStruct((num_tiles, 1, 128), jnp.float32),
        grid_spec=pltpu.PrefetchScalarGridSpec(
            num_scalar_prefetch=0,
            grid=(num_tiles,),
            in_specs=[
                pl.BlockSpec((TB, D), lambda i: (i, 0)),     # features tile (native dtype)
                pl.BlockSpec((P, D), lambda i: (0, 0)),      # prototypes (constant block)
                pl.BlockSpec((TB, CL), lambda i: (i, 0)),    # logits tile (native dtype/width)
                pl.BlockSpec((TB, 1), lambda i: (i, 0)),     # labels tile
            ],
            out_specs=pl.BlockSpec((1, 1, 128), lambda i: (i, 0, 0)),
        ),
        compiler_params=pltpu.CompilerParams(
            dimension_semantics=("parallel",),
            vmem_limit_bytes=vmem_limit,
        ),
    )(features_front, protos_n, logits, labels2d)

    totals = jnp.sum(partials, axis=(0, 1))      # [128]; lane 0 = ce_sum, lane 1 = sim_sum
    loss_ce = totals[0] / B                      # F.cross_entropy reduction='mean'
    simloss = -totals[1] / B
    if jigsaw:                                   # opt.jigsaw == 'True': beta not applied
        return alpha * simloss + loss_ce
    return alpha * simloss + beta * loss_ce


def _reference_loss(features_front, logits, labels, text_prototype, *,
                    num_class, temperature, alpha, beta, jigsaw):
    """Pure-JAX mirror of the PyTorch forward (for correctness checking)."""
    B = logits.shape[0]
    log_sm = jax.nn.log_softmax(logits.astype(jnp.float32), axis=1)
    loss_ce = -jnp.mean(log_sm[jnp.arange(B), labels])
    protos = text_prototype / jnp.maximum(
        jnp.sqrt(jnp.sum(text_prototype ** 2, axis=1, keepdims=True)), 1e-12)
    fdp = jax.lax.dot_general(
        features_front, protos, (((1,), (1,)), ((), ())),
        precision=jax.lax.Precision.HIGHEST) / temperature
    lmax = jnp.max(fdp, axis=1, keepdims=True)
    lg = fdp - lmax
    log_prob = lg - jnp.log(jnp.sum(jnp.exp(lg), axis=1, keepdims=True))
    mask = (labels[:, None] == jnp.arange(num_class - 1)[None, :]).astype(jnp.float32)
    simloss = -jnp.mean(jnp.sum(mask * log_prob, axis=1))
    if jigsaw:
        return alpha * simloss + loss_ce
    return alpha * simloss + beta * loss_ce


if __name__ == "__main__":
    key = jax.random.PRNGKey(0)
    k1, k2, k3, k4, k5, k6 = jax.random.split(key, 6)

    num_class = 5                  # classifier classes; prototypes exist for the first 4
    temp_ci = 0.1
    D = 32

    # --- check 1: small batch, single tile ---
    B = 8
    features_front = jax.random.normal(k1, (B, D), dtype=jnp.float32)
    logits = jax.random.normal(k2, (B, num_class), dtype=jnp.float32)
    text_prototype = jax.random.normal(k3, (num_class - 1, D), dtype=jnp.float32)
    labels = jnp.array([0, 1, 2, 3, 4, 1, 4, 2], dtype=jnp.int32)  # incl. prototype-less class

    loss = ourloss(features_front, logits, labels, text_prototype,
                   num_class=num_class, temperature=temp_ci,
                   alpha=1.0, beta=1.0, jigsaw=True)
    loss = jax.block_until_ready(loss)
    ref = _reference_loss(features_front, logits, labels, text_prototype,
                          num_class=num_class, temperature=temp_ci,
                          alpha=1.0, beta=1.0, jigsaw=True)
    assert jnp.isfinite(loss), loss
    assert jnp.allclose(loss, ref, rtol=5e-2, atol=5e-2), (loss, ref)

    # --- check 2: batch not a multiple of the tile -> exercises multi-tile + tail masking ---
    B2 = 20
    features2 = jax.random.normal(k4, (B2, D), dtype=jnp.float32)
    logits2 = jax.random.normal(k5, (B2, num_class), dtype=jnp.float32)
    labels2 = jax.random.randint(k6, (B2,), 0, num_class, dtype=jnp.int32)

    loss2 = ourloss(features2, logits2, labels2, text_prototype,
                    num_class=num_class, temperature=temp_ci,
                    alpha=1.0, beta=0.5, jigsaw=False, block_rows=8)
    loss2 = jax.block_until_ready(loss2)
    ref2 = _reference_loss(features2, logits2, labels2, text_prototype,
                           num_class=num_class, temperature=temp_ci,
                           alpha=1.0, beta=0.5, jigsaw=False)
    assert jnp.isfinite(loss2), loss2
    assert jnp.allclose(loss2, ref2, rtol=5e-2, atol=5e-2), (loss2, ref2)

    print("KERNEL_OK")
</pallas_src>

<mosaic_0001>
module attributes {stable_mosaic.version = 11 : i64} {
  func.func @_ourloss_kernel(%arg0: i32, %arg1: memref<8x32xf32, #tpu.memory_space<vmem>>, %arg2: memref<4x32xf32, #tpu.memory_space<vmem>>, %arg3: memref<8x5xf32, #tpu.memory_space<vmem>>, %arg4: memref<8x1xi32, #tpu.memory_space<vmem>>, %arg5: memref<1x1x128xf32, #tpu.memory_space<vmem>>) attributes {dimension_semantics = [#tpu.dimension_semantics<parallel>], iteration_bounds = array<i64: 1>, scalar_prefetch = 0 : i64, scratch_operands = 0 : i64, tpu.core_type = #tpu.core_type<tc>, window_params = [{transform_indices = @transform_0, window_bounds = array<i64: 8, 32>}, {pipeline_mode = #tpu.pipeline_mode<synchronous>, transform_indices = @transform_1, window_bounds = array<i64: 4, 32>}, {transform_indices = @transform_2, window_bounds = array<i64: 8, 5>}, {transform_indices = @transform_3, window_bounds = array<i64: 8, 1>}, {transform_indices = @transform_4, window_bounds = array<i64: 1, 1, 128>}]} {
    %c0 = arith.constant 0 : index
    %c0_0 = arith.constant 0 : index
    %0 = vector.load %arg1[%c0, %c0_0] : memref<8x32xf32, #tpu.memory_space<vmem>>, vector<8x32xf32>
    %c0_1 = arith.constant 0 : index
    %c0_2 = arith.constant 0 : index
    %1 = vector.load %arg2[%c0_1, %c0_2] : memref<4x32xf32, #tpu.memory_space<vmem>>, vector<4x32xf32>
    %c0_3 = arith.constant 0 : index
    %c0_4 = arith.constant 0 : index
    %2 = vector.load %arg3[%c0_3, %c0_4] : memref<8x5xf32, #tpu.memory_space<vmem>>, vector<8x5xf32>
    %c0_5 = arith.constant 0 : index
    %c0_6 = arith.constant 0 : index
    %3 = vector.load %arg4[%c0_5, %c0_6] : memref<8x1xi32, #tpu.memory_space<vmem>>, vector<8x1xi32>
    %c8_i32 = arith.constant 8 : i32
    %4 = arith.muli %arg0, %c8_i32 : i32
    %5 = tpu.iota {dimensions = array<i32: 0>} : vector<8x1xi32>
    %6 = vector.broadcast %4 : i32 to vector<8x1xi32>
    %7 = arith.addi %6, %5 : vector<8x1xi32>
    %c8_i32_7 = arith.constant 8 : i32
    %8 = vector.broadcast %c8_i32_7 : i32 to vector<8x1xi32>
    %9 = arith.cmpi slt, %7, %8 : vector<8x1xi32>
    %cst = arith.constant dense<0xFF800000> : vector<8xf32>
    %10 = vector.multi_reduction <maximumf>, %2, %cst [1] : vector<8x5xf32> to vector<8xf32>
    %11 = vector.shape_cast %10 : vector<8xf32> to vector<8x1xf32>
    %12 = vector.broadcast %11 : vector<8x1xf32> to vector<8x5xf32>
    %13 = arith.subf %2, %12 : vector<8x5xf32>
    %14 = math.exp %13 : vector<8x5xf32>
    %cst_8 = arith.constant dense<0.000000e+00> : vector<8xf32>
    %15 = vector.multi_reduction <add>, %14, %cst_8 [1] : vector<8x5xf32> to vector<8xf32>
    %16 = vector.shape_cast %15 : vector<8xf32> to vector<8x1xf32>
    %17 = math.log %16 : vector<8x1xf32>
    %18 = arith.addf %11, %17 : vector<8x1xf32>
    %19 = tpu.iota {dimensions = array<i32: 1>} : vector<8x5xi32>
    %20 = vector.broadcast %3 : vector<8x1xi32> to vector<8x5xi32>
    %21 = arith.cmpi eq, %19, %20 : vector<8x5xi32>
    %cst_9 = arith.constant 0.000000e+00 : f32
    %22 = vector.broadcast %cst_9 : f32 to vector<8x5xf32>
    %23 = arith.select %21, %2, %22 : vector<8x5xi1>, vector<8x5xf32>
    %cst_10 = arith.constant dense<0.000000e+00> : vector<8xf32>
    %24 = vector.multi_reduction <add>, %23, %cst_10 [1] : vector<8x5xf32> to vector<8xf32>
    %25 = vector.shape_cast %24 : vector<8xf32> to vector<8x1xf32>
    %26 = arith.subf %18, %25 : vector<8x1xf32>
    %cst_11 = arith.constant 0.000000e+00 : f32
    %27 = vector.broadcast %cst_11 : f32 to vector<8x1xf32>
    %28 = arith.select %9, %26, %27 : vector<8x1xi1>, vector<8x1xf32>
    %cst_12 = arith.constant dense<0.000000e+00> : vector<8x4xf32>
    %29 = tpu.matmul %0, %1, %cst_12 {dimension_numbers = #tpu.dot_dimension_numbers<[1], [1], [0], [0], [0, 0, 1, 0], [], []>} : vector<8x32xf32>, vector<4x32xf32>, vector<8x4xf32> -> vector<8x4xf32>
    %cst_13 = arith.constant 1.000000e+01 : f32
    %30 = vector.broadcast %cst_13 : f32 to vector<8x4xf32>
    %31 = arith.mulf %29, %30 : vector<8x4xf32>
    %cst_14 = arith.constant dense<0xFF800000> : vector<8xf32>
    %32 = vector.multi_reduction <maximumf>, %31, %cst_14 [1] : vector<8x4xf32> to vector<8xf32>
    %33 = vector.shape_cast %32 : vector<8xf32> to vector<8x1xf32>
    %34 = vector.broadcast %33 : vector<8x1xf32> to vector<8x4xf32>
    %35 = arith.subf %31, %34 : vector<8x4xf32>
    %36 = math.exp %35 : vector<8x4xf32>
    %cst_15 = arith.constant dense<0.000000e+00> : vector<8xf32>
    %37 = vector.multi_reduction <add>, %36, %cst_15 [1] : vector<8x4xf32> to vector<8xf32>
    %38 = vector.shape_cast %37 : vector<8xf32> to vector<8x1xf32>
    %39 = math.log %38 : vector<8x1xf32>
    %40 = arith.addf %33, %39 : vector<8x1xf32>
    %41 = tpu.iota {dimensions = array<i32: 1>} : vector<8x4xi32>
    %42 = vector.broadcast %3 : vector<8x1xi32> to vector<8x4xi32>
    %43 = arith.cmpi eq, %41, %42 : vector<8x4xi32>
    %cst_16 = arith.constant 0.000000e+00 : f32
    %44 = vector.broadcast %cst_16 : f32 to vector<8x4xf32>
    %45 = arith.select %43, %31, %44 : vector<8x4xi1>, vector<8x4xf32>
    %cst_17 = arith.constant dense<0.000000e+00> : vector<8xf32>
    %46 = vector.multi_reduction <add>, %45, %cst_17 [1] : vector<8x4xf32> to vector<8xf32>
    %47 = vector.shape_cast %46 : vector<8xf32> to vector<8x1xf32>
    %c0_i32 = arith.constant 0 : i32
    %48 = vector.broadcast %c0_i32 : i32 to vector<8x1xi32>
    %49 = arith.cmpi sge, %3, %48 : vector<8x1xi32>
    %c4_i32 = arith.constant 4 : i32
    %50 = vector.broadcast %c4_i32 : i32 to vector<8x1xi32>
    %51 = arith.cmpi slt, %3, %50 : vector<8x1xi32>
    %52 = arith.andi %49, %51 : vector<8x1xi1>
    %53 = arith.extui %52 : vector<8x1xi1> to vector<8x1xi32>
    %54 = arith.sitofp %53 : vector<8x1xi32> to vector<8x1xf32>
    %55 = arith.mulf %54, %40 : vector<8x1xf32>
    %56 = arith.subf %47, %55 : vector<8x1xf32>
    %cst_18 = arith.constant 0.000000e+00 : f32
    %57 = vector.broadcast %cst_18 : f32 to vector<8x1xf32>
    %58 = arith.select %9, %56, %57 : vector<8x1xi1>, vector<8x1xf32>
    %59 = tpu.iota {dimensions = array<i32: 1>} : vector<8x128xi32>
    %c0_i32_19 = arith.constant 0 : i32
    %60 = vector.broadcast %c0_i32_19 : i32 to vector<8x128xi32>
    %61 = arith.cmpi eq, %59, %60 : vector<8x128xi32>
    %cst_20 = arith.constant 0.000000e+00 : f32
    %62 = vector.shape_cast %28 : vector<8x1xf32> to vector<8x1xf32>
    %63 = vector.broadcast %62 : vector<8x1xf32> to vector<8x128xf32>
    %64 = vector.broadcast %cst_20 : f32 to vector<8x128xf32>
    %65 = arith.select %61, %63, %64 : vector<8x128xi1>, vector<8x128xf32>
    %c1_i32 = arith.constant 1 : i32
    %66 = vector.broadcast %c1_i32 : i32 to vector<8x128xi32>
    %67 = arith.cmpi eq, %59, %66 : vector<8x128xi32>
    %cst_21 = arith.constant 0.000000e+00 : f32
    %68 = vector.shape_cast %58 : vector<8x1xf32> to vector<8x1xf32>
    %69 = vector.broadcast %68 : vector<8x1xf32> to vector<8x128xf32>
    %70 = vector.broadcast %cst_21 : f32 to vector<8x128xf32>
    %71 = arith.select %67, %69, %70 : vector<8x128xi1>, vector<8x128xf32>
    %72 = arith.addf %65, %71 : vector<8x128xf32>
    %cst_22 = arith.constant dense<0.000000e+00> : vector<128xf32>
    %73 = vector.multi_reduction <add>, %72, %cst_22 [0] : vector<8x128xf32> to vector<128xf32>
    %74 = vector.shape_cast %73 : vector<128xf32> to vector<1x128xf32>
    %c0_23 = arith.constant 0 : index
    %c0_24 = arith.constant 0 : index
    %c0_25 = arith.constant 0 : index
    %75 = vector.load %arg5[%c0_23, %c0_24, %c0_25] : memref<1x1x128xf32, #tpu.memory_space<vmem>>, vector<1x1x128xf32>
    %76 = vector.shape_cast %75 : vector<1x1x128xf32> to vector<1x128xf32>
    %77 = vector.shape_cast %74 : vector<1x128xf32> to vector<1x1x128xf32>
    tpu.vector_store %arg5[%c0_23, %c0_24, %c0_25], %77 {strides = array<i32>} : memref<1x1x128xf32, #tpu.memory_space<vmem>>, vector<1x1x128xf32>,
    return
  }
  func.func @transform_0(%arg0: i32) -> (i32, i32) {
    %c0_i32 = arith.constant 0 : i32
    %c0_i32_0 = arith.constant 0 : i32
    return %arg0, %c0_i32 : i32, i32
  }
  func.func @transform_1(%arg0: i32) -> (i32, i32) {
    %c0_i32 = arith.constant 0 : i32
    %c0_i32_0 = arith.constant 0 : i32
    %c0_i32_1 = arith.constant 0 : i32
    return %c0_i32, %c0_i32_0 : i32, i32
  }
  func.func @transform_2(%arg0: i32) -> (i32, i32) {
    %c0_i32 = arith.constant 0 : i32
    %c0_i32_0 = arith.constant 0 : i32
    return %arg0, %c0_i32 : i32, i32
  }
  func.func @transform_3(%arg0: i32) -> (i32, i32) {
    %c0_i32 = arith.constant 0 : i32
    %c0_i32_0 = arith.constant 0 : i32
    return %arg0, %c0_i32 : i32, i32
  }
  func.func @transform_4(%arg0: i32) -> (i32, i32, i32) {
    %c0_i32 = arith.constant 0 : i32
    %c0_i32_0 = arith.constant 0 : i32
    %c0_i32_1 = arith.constant 0 : i32
    return %arg0, %c0_i32, %c0_i32_0 : i32, i32, i32
  }
}

</mosaic_0001>

<llo_original>
// kernel: tpu_custom_call.1
$region0: #{tpu_custom_call.1}
  #allocation0 [shape = 'u32[]', space=smem, size = 0x4, offset = 0x4, fixed_abs, tag = 'smem constant byte address 0x4 - core index']
  #allocation1 [shape = 'u32[72,128]{1,0:T(1,128)}', space=vmem, size = 0x9000, scoped, tag = 'internal scratch']
  %s0 = inlined_call_operand.vmem [shape: f32[8,32], index: 0, kind: input, shape index: {}]
  %s1 = inlined_call_operand.hbm [shape: f32[4,32], index: 1, kind: input, shape index: {}]
  %s2 = inlined_call_operand.hbm [shape: f32[8,5], index: 2, kind: input, shape index: {}]
  %s3 = inlined_call_operand.vmem [shape: s32[8,1], index: 3, kind: input, shape index: {}]
  %s4 = inlined_call_operand.hbm [shape: f32[1,1,128], index: 4, kind: output, shape index: {}]
  %s5 = sld [smem:[#allocation0]]
  $region34: #{tpu_custom_call.1} parent=0
    _
  %s7 = ssub.s32 1, %s5
  %s8 = scalar_select 0, %s7, %s5
  $region1: #{tpu_custom_call.1} parent=0
    #allocation2 [shape = 'u8[2048]{0}', space=vmem, size = 0x800, scoped, tag = 'input window, operand 1, single buffered']
    #allocation3 [shape = 's32[1]{0}', space=sflag, size = 0x4, scoped, tag = 'scoped memory for tpu_custom_call.1']
    #allocation4 [shape = 's32[1]{0}', space=sflag, size = 0x4, scoped, tag = 'scoped memory for tpu_custom_call.1']
    #allocation5 [shape = 'u8[4096]{0}', space=vmem, size = 0x1000, scoped, tag = 'input window, operand 2, single buffered']
    #allocation6 [shape = 's32[1]{0}', space=sflag, size = 0x4, scoped, tag = 'scoped memory for tpu_custom_call.1']
    #allocation7 [shape = 'u8[512]{0}', space=vmem, size = 0x400, scoped, tag = 'output window, operand 0, single buffered']
    %9 = vsyncpa [#allocation3], 0
    %10 = vsyncpa [#allocation6], 0
    %11 = vsyncpa [#allocation4], 0
    // Predicated region
    $region2: #{tpu_custom_call.1} parent=1 // pred_check
      _
    $region3: #{tpu_custom_call.1} parent=1 // pred_check_branch
      %13 = sbr.rel (0) target = $region5
    $region4: #{tpu_custom_call.1} parent=1 // pred_region
      _
    $region5: #{tpu_custom_call.1} parent=1 // pred_fallthru
      _
    // Predicated region
    $region6: #{tpu_custom_call.1} parent=1 // pred_check
      _
    $region7: #{tpu_custom_call.1} parent=1 // pred_check_branch
      %15 = sbr.rel (0) target = $region9
    $region8: #{tpu_custom_call.1} parent=1 // pred_region
      %17 = vsyncadd [#allocation3], 0
      %s19 = sshll.u32 %s1, 4
      %s20 = int_to_ptr.hbm [resolvable:$true] %s19
      %s21 = sshll.u32 [#allocation2], 4
      %s22 = int_to_ptr.vmem [resolvable:$true] %s21
      %24 = dma.hbm_to_vmem [thread:$0]  %s20, 64, %s22, [#allocation3]
    $region9: #{tpu_custom_call.1} parent=1 // pred_fallthru
      _
    // Predicated region
    $region10: #{tpu_custom_call.1} parent=1 // pred_check
      _
    $region11: #{tpu_custom_call.1} parent=1 // pred_check_branch
      %26 = sbr.rel (0) target = $region13
    $region12: #{tpu_custom_call.1} parent=1 // pred_region
      %28 = vsyncadd [#allocation6], 0
      %s30 = sshll.u32 %s2, 4
      %s31 = int_to_ptr.hbm [resolvable:$true] %s30
      %s32 = sshll.u32 [#allocation5], 4
      %s33 = int_to_ptr.vmem [resolvable:$true] %s32
      %35 = dma.hbm_to_vmem [thread:$0]  %s31, 128, %s33, [#allocation6]
    $region13: #{tpu_custom_call.1} parent=1 // pred_fallthru
      _
    // Predicated region
    $region14: #{tpu_custom_call.1} parent=1 // pred_check
      _
    $region15: #{tpu_custom_call.1} parent=1 // pred_check_branch
      %37 = sbr.rel (0) target = $region17
    $region16: #{tpu_custom_call.1} parent=1 // pred_region
      _
    $region17: #{tpu_custom_call.1} parent=1 // pred_fallthru
      _
    // Predicated region
    $region18: #{tpu_custom_call.1} parent=1 // pred_check
      _
    $region19: #{tpu_custom_call.1} parent=1 // pred_check_branch
      %39 = sbr.rel (0) target = $region21
    $region20: #{tpu_custom_call.1} parent=1 // pred_region
      %41 = dma.done [#allocation3], 64
    $region21: #{tpu_custom_call.1} parent=1 // pred_fallthru
      _
    // Predicated region
    $region22: #{tpu_custom_call.1} parent=1 // pred_check
      _
    $region23: #{tpu_custom_call.1} parent=1 // pred_check_branch
      %43 = sbr.rel (0) target = $region25
    $region24: #{tpu_custom_call.1} parent=1 // pred_region
      %45 = dma.done [#allocation6], 128
    $region25: #{tpu_custom_call.1} parent=1 // pred_fallthru
      _
    %v46 = vld [vmem:[%s0] sm:$0xff]
    %v47 = vld [vmem:[#allocation2] sm:$0xf]
    %v48 = vld [vmem:[#allocation5] sm:$0xff]
    %v49 = vld [vmem:[%s3] sm:$0xff]
    %s50 = smul.u32 0, 8
    %v51 = vlaneseq
    %v52 = vshrl.u32 %v51, 7
    %v53 = vstv %s50
    %v54 = vadd.s32 %v53, %v52
    %vm55 = vcmp.lt.s32.totalorder %v54, 8
    %vm56 = vcmask 39936
    %v57 = vsel %vm56, %v48, -inf
    %58 = vmax.xlane.f32.xlu0 %v57
    %v59 = vpop.xlane.xlu0 %58
    %v60 = vsub.f32 %v48, %v59
    %v61 = vmul.f32 %v60, 1.442695
    %v62 = vpow.pop %v61
    %v63 = vsel %vm56, %v62, 0.0
    %64 = vadd.xlane.f32.xlu0 %v63
    %v65 = vpop.xlane.xlu0 %64
    %v66 = vlog2.pop %v65
    %v67 = vmul.f32 %v66, 0.6931472
    %v68 = vadd.f32 %v59, %v67
    %v69 = vlaneseq
    %v70 = vand.u32 %v69, 127
    %71 = vset.pattern.permute.xlu0 0
    %72 = vperm.xlu0 %71, %v49
    %v73 = vpop.permute.xlu0 %72
    %vm74 = vcmp.eq.s32.totalorder %v70, %v73
    %v75 = vsel %vm74, %v48, 0.0
    %v76 = vsel %vm56, %v75, 0.0
    %77 = vadd.xlane.f32.xlu0 %v76
    %v78 = vpop.xlane.xlu0 %77
    %v79 = vsub.f32 %v68, %v78
    %v80 = vsel %vm55, %v79, 0.0
    %vm81 = vcmask 261120
    %v83 = vsel %vm81, %v46, 0
    %v86 = vsel %vm81, %v47, 0
    %88 = vmatpush.xpose.msra.mxu0 0.0
    %89 = vmatpush.xpose.msra.mxu0 0.0
    %90 = vmatpush.xpose.msra.mxu0 0.0
    %91 = vmatpush.xpose.msra.mxu0 0.0
    %92 = vmatpush.xpose.msra.mxu0 0.0
    %93 = vmatpush.xpose.msra.mxu0 0.0
    %94 = vmatpush.xpose.msra.mxu0 0.0
    %95 = vmatpush.xpose.msra.mxu0 0.0
    %96 = vmatpush.xpose.msra.mxu0 0.0
    %97 = vmatpush.xpose.msra.mxu0 0.0
    %98 = vmatpush.xpose.msra.mxu0 0.0
    %99 = vmatpush.xpose.msra.mxu0 0.0
    %100 = vmatpush.xpose.msra.mxu0 0.0
    %101 = vmatpush.xpose.msra.mxu0 0.0
    %102 = vmatpush.xpose.msra.mxu0 0.0
    %103 = vmatpush.xpose.msra.mxu0 %v86
    %104 = vmatmul.f32.gmra.mxu0 %v83
    %v105 = vpop.f32.mrf.mxu0
    %v106 = vadd.f32 0.0, %v105
    %107 = vdwg.mxu0
    %v108 = vmul.f32 %v106, 10.0
    %vm109 = vcmask 31744
    %v110 = vsel %vm109, %v108, -inf
    %111 = vmax.xlane.f32.xlu0 %v110
    %v112 = vpop.xlane.xlu0 %111
    %v113 = vsub.f32 %v108, %v112
    %v114 = vmul.f32 %v113, 1.442695
    %v115 = vpow.pop %v114
    %v116 = vsel %vm109, %v115, 0.0
    %117 = vadd.xlane.f32.xlu0 %v116
    %v118 = vpop.xlane.xlu0 %117
    %v119 = vlog2.pop %v118
    %v120 = vmul.f32 %v119, 0.6931472
    %v121 = vadd.f32 %v112, %v120
    %v122 = vsel %vm74, %v108, 0.0
    %v123 = vsel %vm109, %v122, 0.0
    %124 = vadd.xlane.f32.xlu0 %v123
    %v125 = vpop.xlane.xlu0 %124
    %vm126 = vcmp.ge.s32.totalorder %v49, 0
    %vm127 = vcmp.lt.s32.totalorder %v49, 4
    %vm128 = vmand %vm126, %vm127
    %v129 = vsel %vm128, 1, 0
    %v130 = vcvt.s32.f32 %v129
    %v131 = vmul.f32 %v130, %v121
    %v132 = vsub.f32 %v125, %v131
    %v133 = vsel %vm55, %v132, 0.0
    %vm134 = vcmp.eq.s32.totalorder %v70, 0
    %v135 = vsel %vm134, %v80, 0.0
    %vm136 = vcmp.eq.s32.totalorder %v70, 1
    %138 = vset.pattern.permute.xlu0 0
    %139 = vperm.xlu0 %138, %v133
    %v140 = vpop.permute.xlu0 %139
    %v142 = vsel %vm136, %v140, 0.0
    %v143 = vadd.f32 %v135, %v142
    %v144 = vrot.slane %v143, 4
    %v145 = vadd.f32 %v143, %v144
    %v146 = vrot.slane %v145, 2
    %v147 = vadd.f32 %v145, %v146
    %v148 = vrot.slane %v147, 1
    %v149 = vadd.f32 %v147, %v148
    %150 = vst [vmem:[#allocation7] sm:$0x1] %v149
    // Predicated region
    $region26: #{tpu_custom_call.1} parent=1 // pred_check
      _
    $region27: #{tpu_custom_call.1} parent=1 // pred_check_branch
      %152 = sbr.rel (0) target = $region29
    $region28: #{tpu_custom_call.1} parent=1 // pred_region
      %154 = vsyncadd [#allocation4], 0
      %s156 = sshll.u32 [#allocation7], 4
      %s157 = int_to_ptr.vmem [resolvable:$true] %s156
      %s158 = sshll.u32 %s4, 4
      %s159 = int_to_ptr.hbm [resolvable:$true] %s158
      %161 = dma.vmem_to_hbm [thread:$0]  %s157, 16, %s159, [#allocation4]
    $region29: #{tpu_custom_call.1} parent=1 // pred_fallthru
      _
    // Predicated region
    $region30: #{tpu_custom_call.1} parent=1 // pred_check
      _
    $region31: #{tpu_custom_call.1} parent=1 // pred_check_branch
      %163 = sbr.rel (0) target = $region33
    $region32: #{tpu_custom_call.1} parent=1 // pred_region
      %165 = dma.done [#allocation4], 16
    $region33: #{tpu_custom_call.1} parent=1 // pred_fallthru
      _
    %166 = vsyncpa [#allocation3], 1
    %167 = vsyncpa [#allocation6], 1
    %168 = vsyncpa [#allocation4], 1

</llo_original>
